<compile_context>
chip_gen: v7x
topology: tpu7x:2x2x1
jax: 0.10.0
libtpu: 0.0.40
codegen_flags: <defaults>
</compile_context>

<pallas_src>
import jax
import jax.numpy as jnp
from jax.experimental import pallas as pl
from jax.experimental.pallas import tpu as pltpu

HIDDEN = 64


def _dqn_kernel(x_ref, w1_ref, b1_ref, w2_ref, b2_ref, w3_ref, b3_ref, out_ref):
    # x tile: (TB, S) f32 -> cast to bf16 in-kernel (MXU operand); biases f32 (1, N).
    x = x_ref[...].astype(jnp.bfloat16)

    # fc1 + ReLU (f32 accumulation, f32 epilogue)
    h1 = jnp.dot(x, w1_ref[...], preferred_element_type=jnp.float32) + b1_ref[...]
    h1 = jnp.maximum(h1, 0.0)                                       # (TB, 64) f32

    # fc2 + ReLU (only the matmul operand is re-cast to bf16)
    h2 = jnp.dot(h1.astype(jnp.bfloat16), w2_ref[...],
                 preferred_element_type=jnp.float32) + b2_ref[...]
    h2 = jnp.maximum(h2, 0.0)                                       # (TB, 64) f32

    # fc3 (no activation)
    out = jnp.dot(h2.astype(jnp.bfloat16), w3_ref[...],
                  preferred_element_type=jnp.float32) + b3_ref[...]
    out_ref[...] = out.astype(out_ref.dtype)                        # (TB, A) f32


def _round_up(v, m):
    return ((v + m - 1) // m) * m


def dqn_forward(x, params, *, batch_tile=4096):
    """x: (B, state_size) float32; params: dict of w1,b1,w2,b2,w3,b3.

    Weights are expected (in, out)-major; bf16 weights are used as-is (cast is a
    no-op if init_params/prepare step already stored them in bf16).
    Returns Q-values of shape (B, action_size), float32.
    """
    w1 = params["w1"].astype(jnp.bfloat16)
    b1 = params["b1"].astype(jnp.float32)
    w2 = params["w2"].astype(jnp.bfloat16)
    b2 = params["b2"].astype(jnp.float32)
    w3 = params["w3"].astype(jnp.bfloat16)
    b3 = params["b3"].astype(jnp.float32)

    B, S = x.shape
    A = w3.shape[1]
    x = x.astype(jnp.float32)

    # --- batch tile selection -------------------------------------------------
    # Big tiles amortize the ~0.35us/step pipeline overhead; cap so that large
    # batches still get >=2 grid steps (both v7x TensorCores busy).
    tb = min(batch_tile, _round_up(B, 8))
    if B >= 512:
        tb = min(tb, _round_up((B + 1) // 2, 8))
    tb = max(tb, 8)

    b_pad = _round_up(B, tb)
    if b_pad != B:
        # Padded tail rows compute garbage (relu of biases) and are sliced off below.
        x = jnp.pad(x, ((0, b_pad - B), (0, 0)))

    grid = (b_pad // tb,)

    # Rough per-step VMEM: double-buffered x/out tiles + f32 intermediates + weights.
    est_vmem = (2 * tb * S * 4) + (2 * tb * A * 4) + (3 * tb * HIDDEN * 4) + (64 * 1024)
    vmem_limit = None
    if est_vmem > 12 * 1024 * 1024:      # only override when above v5e's scoped default margin
        vmem_limit = min(int(est_vmem * 2), 96 * 1024 * 1024)

    # Weights/biases: full-array resident blocks, single-buffered (no re-DMA, no
    # dead second buffer).
    def resident(a):
        return pl.BlockSpec(a.shape, lambda i: (0,) * a.ndim,
                            pipeline_mode=pl.Buffered(1))

    out_padded = pl.pallas_call(
        _dqn_kernel,
        out_shape=jax.ShapeDtypeStruct((b_pad, A), jnp.float32),
        grid=grid,
        in_specs=[
            pl.BlockSpec((tb, S), lambda i: (i, 0)),   # x: pipelined batch tiles (f32)
            resident(w1), resident(b1),
            resident(w2), resident(b2),
            resident(w3), resident(b3),
        ],
        # A=8 < 128 lanes -> masked vst per result vreg, but the HBM DMA is still
        # contiguous; accepted rather than 16x-ing output write bytes.
        out_specs=pl.BlockSpec((tb, A), lambda i: (i, 0)),
        compiler_params=pltpu.CompilerParams(
            dimension_semantics=("parallel",),
            vmem_limit_bytes=vmem_limit,
        ),
    )(x, w1, b1, w2, b2, w3, b3)

    return out_padded[:B]


def init_params(key, state_size, action_size, hidden=HIDDEN):
    """Deterministic init mimicking nn.Linear default (uniform +/- 1/sqrt(fan_in)).

    Weights are stored in bf16 once here (hoisted out of the per-call path);
    biases stay f32 with shape (1, out) for in-kernel row broadcast.
    """
    ks = jax.random.split(key, 6)

    def lin(kw, kb, fan_in, fan_out):
        bound = 1.0 / jnp.sqrt(fan_in)
        w = jax.random.uniform(kw, (fan_in, fan_out), jnp.float32, -bound, bound)
        b = jax.random.uniform(kb, (1, fan_out), jnp.float32, -bound, bound)
        return w.astype(jnp.bfloat16), b

    w1, b1 = lin(ks[0], ks[1], state_size, hidden)
    w2, b2 = lin(ks[2], ks[3], hidden, hidden)
    w3, b3 = lin(ks[4], ks[5], hidden, action_size)
    return {"w1": w1, "b1": b1, "w2": w2, "b2": b2, "w3": w3, "b3": b3}


if __name__ == "__main__":
    key = jax.random.PRNGKey(0)
    k_x, k_p = jax.random.split(key)

    batch = 8            # small-batch path: single tile, no pad
    state_size = 16
    action_size = 8

    x = jax.random.normal(k_x, (batch, state_size), jnp.float32)
    params = init_params(k_p, state_size, action_size)

    out = dqn_forward(x, params)
    jax.block_until_ready(out)

    # Reference check. bf16-matched reference (tight) + f32 reference (loose).
    def ref(x, p, mm_dtype):
        h1 = jnp.maximum(
            jnp.dot(x.astype(mm_dtype), p["w1"].astype(mm_dtype),
                    preferred_element_type=jnp.float32)
            + p["b1"].astype(jnp.float32), 0.0)
        h2 = jnp.maximum(
            jnp.dot(h1.astype(mm_dtype), p["w2"].astype(mm_dtype),
                    preferred_element_type=jnp.float32)
            + p["b2"].astype(jnp.float32), 0.0)
        return (jnp.dot(h2.astype(mm_dtype), p["w3"].astype(mm_dtype),
                        preferred_element_type=jnp.float32)
                + p["b3"].astype(jnp.float32))

    expected_bf16 = ref(x, params, jnp.bfloat16)
    expected_f32 = ref(x, params, jnp.float32)

    assert out.shape == (batch, action_size)
    assert jnp.allclose(out, expected_bf16, atol=1e-5, rtol=1e-5)
    assert jnp.allclose(out, expected_f32, atol=3e-2, rtol=3e-2)

    # Exercise the multi-tile / padded path once as well (non-multiple of tile).
    big_b = 1030
    x_big = jax.random.normal(k_x, (big_b, state_size), jnp.float32)
    out_big = dqn_forward(x_big, params, batch_tile=512)
    jax.block_until_ready(out_big)
    assert out_big.shape == (big_b, action_size)
    assert jnp.allclose(out_big, ref(x_big, params, jnp.bfloat16), atol=1e-5, rtol=1e-5)

    print("KERNEL_OK")
</pallas_src>

<mosaic_0001>
module attributes {stable_mosaic.version = 11 : i64} {
  func.func @_dqn_kernel(%arg0: i32, %arg1: memref<8x16xf32, #tpu.memory_space<vmem>>, %arg2: memref<16x64xbf16, #tpu.memory_space<vmem>>, %arg3: memref<1x64xf32, #tpu.memory_space<vmem>>, %arg4: memref<64x64xbf16, #tpu.memory_space<vmem>>, %arg5: memref<1x64xf32, #tpu.memory_space<vmem>>, %arg6: memref<64x8xbf16, #tpu.memory_space<vmem>>, %arg7: memref<1x8xf32, #tpu.memory_space<vmem>>, %arg8: memref<8x8xf32, #tpu.memory_space<vmem>>) attributes {dimension_semantics = [#tpu.dimension_semantics<parallel>], iteration_bounds = array<i64: 1>, scalar_prefetch = 0 : i64, scratch_operands = 0 : i64, tpu.core_type = #tpu.core_type<tc>, window_params = [{transform_indices = @transform_0, window_bounds = array<i64: 8, 16>}, {pipeline_mode = #tpu.pipeline_mode<synchronous>, transform_indices = @transform_1, window_bounds = array<i64: 16, 64>}, {pipeline_mode = #tpu.pipeline_mode<synchronous>, transform_indices = @transform_2, window_bounds = array<i64: 1, 64>}, {pipeline_mode = #tpu.pipeline_mode<synchronous>, transform_indices = @transform_3, window_bounds = array<i64: 64, 64>}, {pipeline_mode = #tpu.pipeline_mode<synchronous>, transform_indices = @transform_4, window_bounds = array<i64: 1, 64>}, {pipeline_mode = #tpu.pipeline_mode<synchronous>, transform_indices = @transform_5, window_bounds = array<i64: 64, 8>}, {pipeline_mode = #tpu.pipeline_mode<synchronous>, transform_indices = @transform_6, window_bounds = array<i64: 1, 8>}, {transform_indices = @transform_7, window_bounds = array<i64: 8, 8>}]} {
    %c0 = arith.constant 0 : index
    %c0_0 = arith.constant 0 : index
    %0 = vector.load %arg1[%c0, %c0_0] : memref<8x16xf32, #tpu.memory_space<vmem>>, vector<8x16xf32>
    %1 = arith.truncf %0 : vector<8x16xf32> to vector<8x16xbf16>
    %c0_1 = arith.constant 0 : index
    %c0_2 = arith.constant 0 : index
    %2 = vector.load %arg2[%c0_1, %c0_2] : memref<16x64xbf16, #tpu.memory_space<vmem>>, vector<16x64xbf16>
    %cst = arith.constant dense<0.000000e+00> : vector<8x64xf32>
    %3 = tpu.matmul %1, %2, %cst {dimension_numbers = #tpu.dot_dimension_numbers<[1], [0], [0], [1], [0, 0, 1, 1], [], []>} : vector<8x16xbf16>, vector<16x64xbf16>, vector<8x64xf32> -> vector<8x64xf32>
    %c0_3 = arith.constant 0 : index
    %c0_4 = arith.constant 0 : index
    %4 = vector.load %arg3[%c0_3, %c0_4] : memref<1x64xf32, #tpu.memory_space<vmem>>, vector<1x64xf32>
    %5 = vector.broadcast %4 : vector<1x64xf32> to vector<8x64xf32>
    %6 = arith.addf %3, %5 : vector<8x64xf32>
    %cst_5 = arith.constant 0.000000e+00 : f32
    %7 = vector.broadcast %cst_5 : f32 to vector<8x64xf32>
    %8 = arith.maximumf %6, %7 : vector<8x64xf32>
    %9 = arith.truncf %8 : vector<8x64xf32> to vector<8x64xbf16>
    %c0_6 = arith.constant 0 : index
    %c0_7 = arith.constant 0 : index
    %10 = vector.load %arg4[%c0_6, %c0_7] : memref<64x64xbf16, #tpu.memory_space<vmem>>, vector<64x64xbf16>
    %cst_8 = arith.constant dense<0.000000e+00> : vector<8x64xf32>
    %11 = tpu.matmul %9, %10, %cst_8 {dimension_numbers = #tpu.dot_dimension_numbers<[1], [0], [0], [1], [0, 0, 1, 1], [], []>} : vector<8x64xbf16>, vector<64x64xbf16>, vector<8x64xf32> -> vector<8x64xf32>
    %c0_9 = arith.constant 0 : index
    %c0_10 = arith.constant 0 : index
    %12 = vector.load %arg5[%c0_9, %c0_10] : memref<1x64xf32, #tpu.memory_space<vmem>>, vector<1x64xf32>
    %13 = vector.broadcast %12 : vector<1x64xf32> to vector<8x64xf32>
    %14 = arith.addf %11, %13 : vector<8x64xf32>
    %cst_11 = arith.constant 0.000000e+00 : f32
    %15 = vector.broadcast %cst_11 : f32 to vector<8x64xf32>
    %16 = arith.maximumf %14, %15 : vector<8x64xf32>
    %17 = arith.truncf %16 : vector<8x64xf32> to vector<8x64xbf16>
    %c0_12 = arith.constant 0 : index
    %c0_13 = arith.constant 0 : index
    %18 = vector.load %arg6[%c0_12, %c0_13] : memref<64x8xbf16, #tpu.memory_space<vmem>>, vector<64x8xbf16>
    %cst_14 = arith.constant dense<0.000000e+00> : vector<8x8xf32>
    %19 = tpu.matmul %17, %18, %cst_14 {dimension_numbers = #tpu.dot_dimension_numbers<[1], [0], [0], [1], [0, 0, 1, 1], [], []>} : vector<8x64xbf16>, vector<64x8xbf16>, vector<8x8xf32> -> vector<8x8xf32>
    %c0_15 = arith.constant 0 : index
    %c0_16 = arith.constant 0 : index
    %20 = vector.load %arg7[%c0_15, %c0_16] : memref<1x8xf32, #tpu.memory_space<vmem>>, vector<1x8xf32>
    %21 = vector.broadcast %20 : vector<1x8xf32> to vector<8x8xf32>
    %22 = arith.addf %19, %21 : vector<8x8xf32>
    %c0_17 = arith.constant 0 : index
    %c0_18 = arith.constant 0 : index
    %23 = vector.load %arg8[%c0_17, %c0_18] : memref<8x8xf32, #tpu.memory_space<vmem>>, vector<8x8xf32>
    tpu.vector_store %arg8[%c0_17, %c0_18], %22 {strides = array<i32>} : memref<8x8xf32, #tpu.memory_space<vmem>>, vector<8x8xf32>,
    return
  }
  func.func @transform_0(%arg0: i32) -> (i32, i32) {
    %c0_i32 = arith.constant 0 : i32
    %c0_i32_0 = arith.constant 0 : i32
    return %arg0, %c0_i32 : i32, i32
  }
  func.func @transform_1(%arg0: i32) -> (i32, i32) {
    %c0_i32 = arith.constant 0 : i32
    %c0_i32_0 = arith.constant 0 : i32
    %c0_i32_1 = arith.constant 0 : i32
    return %c0_i32, %c0_i32_0 : i32, i32
  }
  func.func @transform_2(%arg0: i32) -> (i32, i32) {
    %c0_i32 = arith.constant 0 : i32
    %c0_i32_0 = arith.constant 0 : i32
    %c0_i32_1 = arith.constant 0 : i32
    return %c0_i32, %c0_i32_0 : i32, i32
  }
  func.func @transform_3(%arg0: i32) -> (i32, i32) {
    %c0_i32 = arith.constant 0 : i32
    %c0_i32_0 = arith.constant 0 : i32
    %c0_i32_1 = arith.constant 0 : i32
    return %c0_i32, %c0_i32_0 : i32, i32
  }
  func.func @transform_4(%arg0: i32) -> (i32, i32) {
    %c0_i32 = arith.constant 0 : i32
    %c0_i32_0 = arith.constant 0 : i32
    %c0_i32_1 = arith.constant 0 : i32
    return %c0_i32, %c0_i32_0 : i32, i32
  }
  func.func @transform_5(%arg0: i32) -> (i32, i32) {
    %c0_i32 = arith.constant 0 : i32
    %c0_i32_0 = arith.constant 0 : i32
    %c0_i32_1 = arith.constant 0 : i32
    return %c0_i32, %c0_i32_0 : i32, i32
  }
  func.func @transform_6(%arg0: i32) -> (i32, i32) {
    %c0_i32 = arith.constant 0 : i32
    %c0_i32_0 = arith.constant 0 : i32
    %c0_i32_1 = arith.constant 0 : i32
    return %c0_i32, %c0_i32_0 : i32, i32
  }
  func.func @transform_7(%arg0: i32) -> (i32, i32) {
    %c0_i32 = arith.constant 0 : i32
    %c0_i32_0 = arith.constant 0 : i32
    return %arg0, %c0_i32 : i32, i32
  }
}

</mosaic_0001>

<llo_original>
// kernel: tpu_custom_call.1
$region0: #{tpu_custom_call.1}
  #allocation0 [shape = 'u32[]', space=smem, size = 0x4, offset = 0x4, fixed_abs, tag = 'smem constant byte address 0x4 - core index']
  #allocation1 [shape = 'u32[144,128]{1,0:T(1,128)}', space=vmem, size = 0x12000, scoped, tag = 'internal scratch']
  %s0 = inlined_call_operand.vmem [shape: f32[8,16], index: 0, kind: input, shape index: {}]
  %s1 = inlined_call_operand.hbm [shape: bf16[16,64], index: 1, kind: input, shape index: {}]
  %s2 = inlined_call_operand.vmem [shape: f32[1,64], index: 2, kind: input, shape index: {}]
  %s3 = inlined_call_operand.vmem [shape: bf16[64,64], index: 3, kind: input, shape index: {}]
  %s4 = inlined_call_operand.vmem [shape: f32[1,64], index: 4, kind: input, shape index: {}]
  %s5 = inlined_call_operand.vmem [shape: bf16[64,8], index: 5, kind: input, shape index: {}]
  %s6 = inlined_call_operand.vmem [shape: f32[1,8], index: 6, kind: input, shape index: {}]
  %s7 = inlined_call_operand.hbm [shape: f32[8,8], index: 7, kind: output, shape index: {}]
  %s8 = sld [smem:[#allocation0]]
  $region42: #{tpu_custom_call.1} parent=0
    _
  %s10 = ssub.s32 1, %s8
  %s11 = scalar_select 0, %s10, %s8
  $region1: #{tpu_custom_call.1} parent=0
    #allocation2 [shape = 'u8[4096]{0}', space=vmem, size = 0x1000, scoped, tag = 'input window, operand 1, single buffered']
    #allocation3 [shape = 's32[1]{0}', space=sflag, size = 0x4, scoped, tag = 'scoped memory for tpu_custom_call.1']
    #allocation4 [shape = 's32[1]{0}', space=sflag, size = 0x4, scoped, tag = 'scoped memory for tpu_custom_call.1']
    #allocation5 [shape = 'u8[4096]{0}', space=vmem, size = 0x1000, scoped, tag = 'output window, operand 0, single buffered']
    %12 = vsyncpa [#allocation3], 0
    %13 = vsyncpa [#allocation4], 0
    // Predicated region
    $region2: #{tpu_custom_call.1} parent=1 // pred_check
      _
    $region3: #{tpu_custom_call.1} parent=1 // pred_check_branch
      %15 = sbr.rel (0) target = $region5
    $region4: #{tpu_custom_call.1} parent=1 // pred_region
      _
    $region5: #{tpu_custom_call.1} parent=1 // pred_fallthru
      _
    // Predicated region
    $region6: #{tpu_custom_call.1} parent=1 // pred_check
      _
    $region7: #{tpu_custom_call.1} parent=1 // pred_check_branch
      %17 = sbr.rel (0) target = $region9
    $region8: #{tpu_custom_call.1} parent=1 // pred_region
      %s19 = ssub.s32 128, 128
      %20 = vsyncadd [#allocation3], %s19
      %s21 = sshll.u32 [#allocation2], 4
      %s22 = int_to_ptr.vmem [resolvable:$true] %s21
      %27 = dma.hbm_to_vmem [thread:$0]  %s1, 128, %s22, [#allocation3], 64, 64, 4
    $region9: #{tpu_custom_call.1} parent=1 // pred_fallthru
      _
    // Predicated region
    $region10: #{tpu_custom_call.1} parent=1 // pred_check
      _
    $region11: #{tpu_custom_call.1} parent=1 // pred_check_branch
      %29 = sbr.rel (0) target = $region13
    $region12: #{tpu_custom_call.1} parent=1 // pred_region
      _
    $region13: #{tpu_custom_call.1} parent=1 // pred_fallthru
      _
    // Predicated region
    $region14: #{tpu_custom_call.1} parent=1 // pred_check
      _
    $region15: #{tpu_custom_call.1} parent=1 // pred_check_branch
      %31 = sbr.rel (0) target = $region17
    $region16: #{tpu_custom_call.1} parent=1 // pred_region
      _
    $region17: #{tpu_custom_call.1} parent=1 // pred_fallthru
      _
    // Predicated region
    $region18: #{tpu_custom_call.1} parent=1 // pred_check
      _
    $region19: #{tpu_custom_call.1} parent=1 // pred_check_branch
      %33 = sbr.rel (0) target = $region21
    $region20: #{tpu_custom_call.1} parent=1 // pred_region
      _
    $region21: #{tpu_custom_call.1} parent=1 // pred_fallthru
      _
    // Predicated region
    $region22: #{tpu_custom_call.1} parent=1 // pred_check
      _
    $region23: #{tpu_custom_call.1} parent=1 // pred_check_branch
      %35 = sbr.rel (0) target = $region25
    $region24: #{tpu_custom_call.1} parent=1 // pred_region
      _
    $region25: #{tpu_custom_call.1} parent=1 // pred_fallthru
      _
    // Predicated region
    $region26: #{tpu_custom_call.1} parent=1 // pred_check
      _
    $region27: #{tpu_custom_call.1} parent=1 // pred_check_branch
      %37 = sbr.rel (0) target = $region29
    $region28: #{tpu_custom_call.1} parent=1 // pred_region
      _
    $region29: #{tpu_custom_call.1} parent=1 // pred_fallthru
      _
    // Predicated region
    $region30: #{tpu_custom_call.1} parent=1 // pred_check
      _
    $region31: #{tpu_custom_call.1} parent=1 // pred_check_branch
      %39 = sbr.rel (0) target = $region33
    $region32: #{tpu_custom_call.1} parent=1 // pred_region
      %40 = dma.done [#allocation3], 128
    $region33: #{tpu_custom_call.1} parent=1 // pred_fallthru
      _
    %v42 = vld [vmem:[%s0] sm:$0xff]
    %v43 = vpack.c.bf16 %v42, %v42
    %v44 = vld [vmem:[#allocation2] sm:$0xf]
    %v45 = vld [vmem:[#allocation2 + $0x4] sm:$0xf]
    %v46 = vld [vmem:[%s2] sm:$0x1]
    %v48 = vlaneseq
    %v49 = vshrl.u32 %v48, 7
    %v50 = vsub.s32 0, %v49
    %v51 = vrot.slane %v46, %v50
    %v55 = vunpack.c.l.b16 %v44
    %v56 = vunpack.c.l.b16 %v45
    %v57 = vpack.c.b16 %v56, %v55
    %vm59 = vcmask 130048
    %v61 = vsel %vm59, %v43, 0
    %63 = vmatprep.subr.bf16.mxu0 0
    %64 = vmatpush1.bf16.msra.mxu0 %v57
    %65 = vmatprep.subr.bf16.mxu0 0
    %66 = vmatpush1.bf16.msra.mxu0 0
    %67 = vmatprep.subr.bf16.mxu0 0
    %68 = vmatpush1.bf16.msra.mxu0 0
    %69 = vmatprep.subr.bf16.mxu0 0
    %70 = vmatpush1.bf16.msra.mxu0 0
    %71 = vmatprep.subr.bf16.mxu0 0
    %72 = vmatpush1.bf16.msra.mxu0 0
    %73 = vmatprep.subr.bf16.mxu0 0
    %74 = vmatpush1.bf16.msra.mxu0 0
    %75 = vmatprep.subr.bf16.mxu0 0
    %76 = vmatpush1.bf16.msra.mxu0 0
    %77 = vmatprep.subr.bf16.mxu0 0
    %78 = vmatpush1.bf16.msra.mxu0 0
    %79 = vmatprep.subr.bf16.mxu0 0
    %80 = vmatpush1.bf16.msra.mxu0 0
    %81 = vmatprep.subr.bf16.mxu0 0
    %82 = vmatpush1.bf16.msra.mxu0 0
    %83 = vmatprep.subr.bf16.mxu0 0
    %84 = vmatpush1.bf16.msra.mxu0 0
    %85 = vmatprep.subr.bf16.mxu0 0
    %86 = vmatpush1.bf16.msra.mxu0 0
    %87 = vmatprep.subr.bf16.mxu0 0
    %88 = vmatpush1.bf16.msra.mxu0 0
    %89 = vmatprep.subr.bf16.mxu0 0
    %90 = vmatpush1.bf16.msra.mxu0 0
    %91 = vmatprep.subr.bf16.mxu0 0
    %92 = vmatpush1.bf16.msra.mxu0 0
    %93 = vmatprep.subr.bf16.mxu0 0
    %94 = vmatpush1.bf16.msra.mxu0 0
    %95 = vmatprep.mubr.bf16.mxu0 0
    %96 = vmatmul.mubr.bf16.gmra.mrb[0].mxu0 %v61
    %v97 = vpop.f32.mrb[0].mxu0
    %v98 = vadd.f32 %v51, %v97
    %v99 = vpop.f32.mrb[0].mxu0
    %v100 = vpop.f32.mrb[0].mxu0
    %v101 = vpop.f32.mrb[0].mxu0
    %102 = vdwg.mxu0
    %v103 = vmax.f32 %v98, 0.0
    %v104 = vpack.c.bf16 %v103, %v103
    %v105 = vld [vmem:[%s3] sm:$0xf]
    %v106 = vld [vmem:[%s3 + $0x4] sm:$0xf]
    %v107 = vld [vmem:[%s3 + $0x8] sm:$0xf]
    %v108 = vld [vmem:[%s3 + $0xc] sm:$0xf]
    %v109 = vld [vmem:[%s3 + $0x10] sm:$0xf]
    %v110 = vld [vmem:[%s3 + $0x14] sm:$0xf]
    %v111 = vld [vmem:[%s3 + $0x18] sm:$0xf]
    %v112 = vld [vmem:[%s3 + $0x1c] sm:$0xf]
    %v113 = vld [vmem:[%s4] sm:$0x1]
    %v115 = vlaneseq
    %v116 = vshrl.u32 %v115, 7
    %v117 = vsub.s32 0, %v116
    %v118 = vrot.slane %v113, %v117
    %v128 = vunpack.c.l.b16 %v105
    %v129 = vunpack.c.l.b16 %v106
    %v130 = vunpack.c.l.b16 %v107
    %v131 = vunpack.c.l.b16 %v108
    %v132 = vunpack.c.l.b16 %v109
    %v133 = vunpack.c.l.b16 %v110
    %v134 = vunpack.c.l.b16 %v111
    %v135 = vunpack.c.l.b16 %v112
    %v136 = vpack.c.b16 %v129, %v128
    %v137 = vpack.c.b16 %v131, %v130
    %v138 = vpack.c.b16 %v133, %v132
    %v139 = vpack.c.b16 %v135, %v134
    %vm144 = vcmask 523264
    %v146 = vsel %vm144, %v104, 0
    %148 = vmatprep.subr.bf16.mxu0 0
    %149 = vmatpush1.bf16.msra.mxu0 %v136
    %150 = vmatprep.subr.bf16.mxu0 0
    %151 = vmatpush1.bf16.msra.mxu0 %v137
    %152 = vmatprep.subr.bf16.mxu0 0
    %153 = vmatpush1.bf16.msra.mxu0 %v138
    %154 = vmatprep.subr.bf16.mxu0 0
    %155 = vmatpush1.bf16.msra.mxu0 %v139
    %156 = vmatprep.subr.bf16.mxu0 0
    %157 = vmatpush1.bf16.msra.mxu0 0
    %158 = vmatprep.subr.bf16.mxu0 0
    %159 = vmatpush1.bf16.msra.mxu0 0
    %160 = vmatprep.subr.bf16.mxu0 0
    %161 = vmatpush1.bf16.msra.mxu0 0
    %162 = vmatprep.subr.bf16.mxu0 0
    %163 = vmatpush1.bf16.msra.mxu0 0
    %164 = vmatprep.subr.bf16.mxu0 0
    %165 = vmatpush1.bf16.msra.mxu0 0
    %166 = vmatprep.subr.bf16.mxu0 0
    %167 = vmatpush1.bf16.msra.mxu0 0
    %168 = vmatprep.subr.bf16.mxu0 0
    %169 = vmatpush1.bf16.msra.mxu0 0
    %170 = vmatprep.subr.bf16.mxu0 0
    %171 = vmatpush1.bf16.msra.mxu0 0
    %172 = vmatprep.subr.bf16.mxu0 0
    %173 = vmatpush1.bf16.msra.mxu0 0
    %174 = vmatprep.subr.bf16.mxu0 0
    %175 = vmatpush1.bf16.msra.mxu0 0
    %176 = vmatprep.subr.bf16.mxu0 0
    %177 = vmatpush1.bf16.msra.mxu0 0
    %178 = vmatprep.subr.bf16.mxu0 0
    %179 = vmatpush1.bf16.msra.mxu0 0
    %180 = vmatprep.mubr.bf16.mxu0 0
    %181 = vmatmul.mubr.bf16.gmra.mrb[0].mxu0 %v146
    %v182 = vpop.f32.mrb[0].mxu0
    %v183 = vadd.f32 %v118, %v182
    %v184 = vpop.f32.mrb[0].mxu0
    %v185 = vpop.f32.mrb[0].mxu0
    %v186 = vpop.f32.mrb[0].mxu0
    %187 = vdwg.mxu0
    %v188 = vmax.f32 %v183, 0.0
    %v189 = vpack.c.bf16 %v188, %v188
    %v190 = vld [vmem:[%s5] sm:$0xf]
    %v191 = vld [vmem:[%s5 + $0x4] sm:$0xf]
    %v192 = vld [vmem:[%s5 + $0x8] sm:$0xf]
    %v193 = vld [vmem:[%s5 + $0xc] sm:$0xf]
    %v194 = vld [vmem:[%s5 + $0x10] sm:$0xf]
    %v195 = vld [vmem:[%s5 + $0x14] sm:$0xf]
    %v196 = vld [vmem:[%s5 + $0x18] sm:$0xf]
    %v197 = vld [vmem:[%s5 + $0x1c] sm:$0xf]
    %v198 = vld [vmem:[%s6] sm:$0x1]
    %v200 = vlaneseq
    %v201 = vshrl.u32 %v200, 7
    %v202 = vsub.s32 0, %v201
    %v203 = vrot.slane %v198, %v202
    %v213 = vunpack.c.l.b16 %v190
    %v214 = vunpack.c.l.b16 %v191
    %v215 = vunpack.c.l.b16 %v192
    %v216 = vunpack.c.l.b16 %v193
    %v217 = vunpack.c.l.b16 %v194
    %v218 = vunpack.c.l.b16 %v195
    %v219 = vunpack.c.l.b16 %v196
    %v220 = vunpack.c.l.b16 %v197
    %v221 = vpack.c.b16 %v214, %v213
    %v222 = vpack.c.b16 %v216, %v215
    %v223 = vpack.c.b16 %v218, %v217
    %v224 = vpack.c.b16 %v220, %v219
    %v230 = vsel %vm144, %v189, 0
    %232 = vmatprep.subr.bf16.mxu0 0
    %233 = vmatpush1.bf16.msra.mxu0 %v221
    %234 = vmatprep.subr.bf16.mxu0 0
    %235 = vmatpush1.bf16.msra.mxu0 %v222
    %236 = vmatprep.subr.bf16.mxu0 0
    %237 = vmatpush1.bf16.msra.mxu0 %v223
    %238 = vmatprep.subr.bf16.mxu0 0
    %239 = vmatpush1.bf16.msra.mxu0 %v224
    %240 = vmatprep.subr.bf16.mxu0 0
    %241 = vmatpush1.bf16.msra.mxu0 0
    %242 = vmatprep.subr.bf16.mxu0 0
    %243 = vmatpush1.bf16.msra.mxu0 0
    %244 = vmatprep.subr.bf16.mxu0 0
    %245 = vmatpush1.bf16.msra.mxu0 0
    %246 = vmatprep.subr.bf16.mxu0 0
    %247 = vmatpush1.bf16.msra.mxu0 0
    %248 = vmatprep.subr.bf16.mxu0 0
    %249 = vmatpush1.bf16.msra.mxu0 0
    %250 = vmatprep.subr.bf16.mxu0 0
    %251 = vmatpush1.bf16.msra.mxu0 0
    %252 = vmatprep.subr.bf16.mxu0 0
    %253 = vmatpush1.bf16.msra.mxu0 0
    %254 = vmatprep.subr.bf16.mxu0 0
    %255 = vmatpush1.bf16.msra.mxu0 0
    %256 = vmatprep.subr.bf16.mxu0 0
    %257 = vmatpush1.bf16.msra.mxu0 0
    %258 = vmatprep.subr.bf16.mxu0 0
    %259 = vmatpush1.bf16.msra.mxu0 0
    %260 = vmatprep.subr.bf16.mxu0 0
    %261 = vmatpush1.bf16.msra.mxu0 0
    %262 = vmatprep.subr.bf16.mxu0 0
    %263 = vmatpush1.bf16.msra.mxu0 0
    %264 = vmatprep.mubr.bf16.mxu0 0
    %265 = vmatmul.mubr.bf16.gmra.mrb[0].mxu0 %v230
    %v266 = vpop.f32.mrb[0].mxu0
    %v267 = vadd.f32 %v203, %v266
    %v268 = vpop.f32.mrb[0].mxu0
    %v269 = vpop.f32.mrb[0].mxu0
    %v270 = vpop.f32.mrb[0].mxu0
    %271 = vdwg.mxu0
    %vm272 = vcmask 64512
    %273 = vst.msk [vmem:[#allocation5] sm:$0xff] %vm272, %v267
    // Predicated region
    $region34: #{tpu_custom_call.1} parent=1 // pred_check
      _
    $region35: #{tpu_custom_call.1} parent=1 // pred_check_branch
      %275 = sbr.rel (0) target = $region37
    $region36: #{tpu_custom_call.1} parent=1 // pred_region
      %s277 = ssub.s32 128, 128
      %278 = vsyncadd [#allocation4], %s277
      %s280 = sshll.u32 [#allocation5], 4
      %s281 = int_to_ptr.vmem [resolvable:$true] %s280
      %283 = dma.vmem_to_hbm [thread:$0]  %s281, 128, %s7, [#allocation4]
    $region37: #{tpu_custom_call.1} parent=1 // pred_fallthru
      _
    // Predicated region
    $region38: #{tpu_custom_call.1} parent=1 // pred_check
      _
    $region39: #{tpu_custom_call.1} parent=1 // pred_check_branch
      %285 = sbr.rel (0) target = $region41
    $region40: #{tpu_custom_call.1} parent=1 // pred_region
      %286 = dma.done [#allocation4], 128
    $region41: #{tpu_custom_call.1} parent=1 // pred_fallthru
      _
    %287 = vsyncpa [#allocation3], 1
    %288 = vsyncpa [#allocation4], 1

</llo_original>
